<compile_context>
chip_gen: v5e
topology: v5e:2x2
jax: 0.10.0
libtpu: 0.0.40
codegen_flags: <defaults>
</compile_context>

<pallas_src>
import functools
import math

import jax
import jax.numpy as jnp
import numpy as np
from jax.experimental import pallas as pl
from jax.experimental.pallas import tpu as pltpu


# ----------------------------------------------------------------------------
# Fused kernel: KxK conv (+bias) -> GroupNorm -> SiLU on one
# (sample, channel-block) tile.  One MXU matmul per grid step.
# ----------------------------------------------------------------------------
def conv_gn_silu_kernel(x_ref, w_ref, p_ref, o_ref, *,
                        ksize, stride, c_in, Ho, Wo, Bp, cpg, eps):
    # x_ref : (1, Cph, L)      lane-flattened, zero-padded (phase-split) input
    # w_ref : (Cb, K*K*c_in)   tap-major conv weights (contraction on lanes)
    # p_ref : (Cb, 3)          [conv bias | GN gamma | GN beta]
    # o_ref : (1, Cb, Ho*Bp)   lane-dense output slab (cols Wo..Bp are junk)
    Cb = o_ref.shape[1]
    Sp = Ho * Bp
    ng = Cb // cpg                      # whole GN groups held in this block

    # ---- assemble the (K*K*c_in, Sp) tap matrix from contiguous lane-dense
    #      ref slices (sublane-aligned: c_in % 8 == 0), then ONE MXU matmul.
    taps = []
    for di in range(ksize):
        for dj in range(ksize):
            pi, oi = di % stride, di // stride
            pj, oj = dj % stride, dj // stride
            base = (pi * stride + pj) * c_in          # static, multiple of 8
            off = oi * Bp + oj                        # static lane offset
            taps.append(x_ref[0, base:base + c_in, off:off + Sp])
    xmat = taps[0] if len(taps) == 1 else jnp.concatenate(taps, axis=0)

    y = jax.lax.dot_general(
        w_ref[...].astype(jnp.bfloat16), xmat.astype(jnp.bfloat16),
        (((1,), (0,)), ((), ())),
        preferred_element_type=jnp.float32)           # (Cb, Sp) f32 accumulate
    y = y + p_ref[:, 0:1]                             # conv bias

    # lane mask for the (Bp - Wo) junk columns of each flattened output row
    col = jax.lax.broadcasted_iota(jnp.int32, (1, Sp), 1)
    mask = ((col % Bp) < Wo).astype(jnp.float32)
    cnt = jnp.float32(cpg * Ho * Wo)

    # ---- two-pass GroupNorm (centered variance, numerically robust) --------
    s1 = jnp.sum(y * mask, axis=1, keepdims=True)                  # (Cb, 1)
    gmean = jnp.sum(s1.reshape(ng, cpg, 1), axis=1, keepdims=True) / cnt
    mean_c = jnp.broadcast_to(gmean, (ng, cpg, 1)).reshape(Cb, 1)
    d = (y - mean_c) * mask
    s2 = jnp.sum(d * d, axis=1, keepdims=True)                     # (Cb, 1)
    gvar = jnp.sum(s2.reshape(ng, cpg, 1), axis=1, keepdims=True) / cnt
    rstd_c = jnp.broadcast_to(jax.lax.rsqrt(gvar + eps),
                              (ng, cpg, 1)).reshape(Cb, 1)

    # normalize + affine folded into one scale/shift elementwise pass (f32)
    scale = p_ref[:, 1:2] * rstd_c
    shift = p_ref[:, 2:3] - mean_c * scale
    z = y * scale + shift

    # ---- SiLU: z * sigmoid(z); reciprocal routed to the EUP -----------------
    o_ref[0, :, :] = z * pl.reciprocal(1.0 + jnp.exp(-z), approx=True)


# ----------------------------------------------------------------------------
# Stride handling without strided in-kernel loads: expose the stride phases as
# extra leading "channels" so every tap is a contiguous slice. Identity for s=1.
# ----------------------------------------------------------------------------
def _phase_split(xp, ksize, stride):
    N, C, Hp, Wp = xp.shape
    s = stride
    if s == 1:
        return xp, Hp, Wp
    o_max = (ksize - 1) // s
    Ho = (Hp - ksize) // s + 1
    Wo = (Wp - ksize) // s + 1
    Ap, Bp = Ho + o_max, Wo + o_max
    Hp2, Wp2 = Ap * s, Bp * s
    xp = xp[:, :, :min(Hp, Hp2), :min(Wp, Wp2)]
    xp = jnp.pad(xp, ((0, 0), (0, 0),
                      (0, Hp2 - xp.shape[2]), (0, Wp2 - xp.shape[3])))
    xph = xp.reshape(N, C, Ap, s, Bp, s)
    xph = jnp.transpose(xph, (0, 3, 5, 1, 2, 4))   # (N, s, s, C, Ap, Bp)
    return xph.reshape(N, s * s * C, Ap, Bp), Ap, Bp


def _padded_bytes(shape, itemsize=4):
    """Bytes of a block after (8, 128) tile padding (f32)."""
    s = list(shape)
    if len(s) >= 1:
        s[-1] = -(-s[-1] // 128) * 128
    if len(s) >= 2:
        s[-2] = -(-s[-2] // 8) * 8
    n = 1
    for d in s:
        n *= d
    return n * itemsize


# ----------------------------------------------------------------------------
# Wrapper: pad + flatten spatial onto lanes, lay out weights tap-major,
# pick the channel block, call the fused kernel.
# ----------------------------------------------------------------------------
def conv_gn_silu(x, w, b, gamma, beta, *, stride=1, padding=0,
                 num_groups=None, eps=1e-5):
    N, C_in, H, W = x.shape
    C_out, C_in_w, KH, KW = w.shape
    assert C_in_w == C_in and KH == KW
    K = KH
    if num_groups is None:
        num_groups = max(1, C_out // 8)          # matches nn.GroupNorm arg
    assert C_out % num_groups == 0
    cpg = C_out // num_groups

    Ho = (H + 2 * padding - K) // stride + 1
    Wo = (W + 2 * padding - K) // stride + 1

    # --- input: spatial pad, channel pad to a sublane multiple, phase split,
    #     flatten spatial onto the lane axis, pad lanes so every tap slice is
    #     in-bounds and lane counts are 128-multiples.
    CinP = ((C_in + 7) // 8) * 8
    xp = x
    if padding:
        xp = jnp.pad(xp, ((0, 0), (0, 0),
                          (padding, padding), (padding, padding)))
    if CinP != C_in:
        xp = jnp.pad(xp, ((0, 0), (0, CinP - C_in), (0, 0), (0, 0)))
    xph, Ap, Bp = _phase_split(xp, K, stride)
    Cph = xph.shape[1]                           # = stride*stride*CinP
    o_max = (K - 1) // stride
    Sp = Ho * Bp
    L = max(pl.cdiv(Ap * Bp + o_max, 128) * 128, 128)
    x_flat = xph.reshape(N, Cph, Ap * Bp)
    if L != Ap * Bp:
        x_flat = jnp.pad(x_flat, ((0, 0), (0, 0), (0, L - Ap * Bp)))

    # --- weights: tap-major (C_out, K*K*CinP); taps row-major (di, dj), the
    #     CinP channels of each tap contiguous (channel-padded with zeros).
    wp = w
    if CinP != C_in:
        wp = jnp.pad(wp, ((0, 0), (0, CinP - C_in), (0, 0), (0, 0)))
    KKC = K * K * CinP
    w2 = jnp.transpose(wp, (0, 2, 3, 1)).reshape(C_out, KKC)

    # --- bias / gamma / beta merged into one small operand (one DMA per step)
    params = jnp.stack([b, gamma, beta], axis=1)             # (C_out, 3)

    # --- channel block: whole GN groups, as large as reasonable (MXU rows)
    Cb = C_out
    if C_out > 128:
        for gpb in range(num_groups - 1, 0, -1):
            if num_groups % gpb:
                continue
            cb = gpb * cpg
            if cb <= 128 and cb % 8 == 0:
                Cb = cb
                break
    Gb = C_out // Cb

    # --- VMEM budget: (8,128)-padded blocks, double-buffered, plus in-kernel
    #     working set; clamped to this generation's physical VMEM.
    blk = (_padded_bytes((1, Cph, L)) + _padded_bytes((Cb, KKC)) +
           _padded_bytes((Cb, 3)) + _padded_bytes((1, Cb, Sp)))
    work = _padded_bytes((KKC, Sp)) + 3 * _padded_bytes((Cb, Sp))
    try:
        cap = int(pltpu.get_tpu_info().vmem_capacity_bytes)
    except Exception:
        cap = 64 << 20          # conservative (v7x-sized) fallback
    vmem_limit = int(min(cap * 3 // 4,
                         max(32 << 20, 2 * blk + work + (4 << 20))))

    kernel = functools.partial(
        conv_gn_silu_kernel, ksize=K, stride=stride, c_in=CinP,
        Ho=Ho, Wo=Wo, Bp=Bp, cpg=cpg, eps=eps)

    out = pl.pallas_call(
        kernel,
        out_shape=jax.ShapeDtypeStruct((N, C_out, Sp), jnp.float32),
        grid=(N, Gb),
        in_specs=[
            pl.BlockSpec((1, Cph, L), lambda n, g: (n, 0, 0)),
            pl.BlockSpec((Cb, KKC), lambda n, g: (g, 0)),
            pl.BlockSpec((Cb, 3), lambda n, g: (g, 0)),
        ],
        out_specs=pl.BlockSpec((1, Cb, Sp), lambda n, g: (n, g, 0)),
        compiler_params=pltpu.CompilerParams(
            dimension_semantics=("parallel", "parallel"),
            vmem_limit_bytes=vmem_limit),
    )(x_flat, w2, params)

    # drop the (Bp - Wo) junk columns and restore NCHW (cheap XLA slice)
    return out.reshape(N, C_out, Ho, Bp)[:, :, :, :Wo]


# ----------------------------------------------------------------------------
# Pure-JAX reference (mirrors the PyTorch module) for correctness checking.
# ----------------------------------------------------------------------------
def ref_conv_gn_silu(x, w, b, gamma, beta, *, stride=1, padding=0,
                     num_groups=None, eps=1e-5):
    C_out = w.shape[0]
    if num_groups is None:
        num_groups = max(1, C_out // 8)
    y = jax.lax.conv_general_dilated(
        x, w, window_strides=(stride, stride),
        padding=((padding, padding), (padding, padding)),
        dimension_numbers=("NCHW", "OIHW", "NCHW"),
        precision=jax.lax.Precision.HIGHEST)
    y = y + b[None, :, None, None]
    N, C, Ho, Wo = y.shape
    yg = y.reshape(N, num_groups, -1)
    mean = yg.mean(axis=2, keepdims=True)
    var = yg.var(axis=2, keepdims=True)
    yn = ((yg - mean) * jax.lax.rsqrt(var + eps)).reshape(N, C, Ho, Wo)
    z = yn * gamma[None, :, None, None] + beta[None, :, None, None]
    return z * jax.nn.sigmoid(z)


def _init_params(key, c_in, c_out, k):
    kw, kb, kg, kbe = jax.random.split(key, 4)
    fan_in = c_in * k * k
    bound = 1.0 / math.sqrt(fan_in)
    w = jax.random.uniform(kw, (c_out, c_in, k, k), jnp.float32, -bound, bound)
    b = jax.random.uniform(kb, (c_out,), jnp.float32, -bound, bound)
    gamma = 1.0 + 0.1 * jax.random.normal(kg, (c_out,), jnp.float32)
    beta = 0.1 * jax.random.normal(kbe, (c_out,), jnp.float32)
    return w, b, gamma, beta


if __name__ == "__main__":
    root = jax.random.PRNGKey(0)
    kx, kp = jax.random.split(root)

    N, C_in, H, W = 2, 4, 16, 16
    x = jax.random.normal(kx, (N, C_in, H, W), jnp.float32)

    configs = [
        # (C_out, kernel_size, stride, padding)
        (32, 3, 1, 1),   # standard 3x3 ConvBnSiLu
        (16, 1, 1, 0),   # pointwise 1x1 ConvBnSiLu
        (32, 3, 2, 1),   # strided 3x3 ConvBnSiLu (downsampling)
    ]
    for i, (c_out, k, s, p) in enumerate(configs):
        w, b, gamma, beta = _init_params(jax.random.fold_in(kp, i), C_in, c_out, k)

        out = conv_gn_silu(x, w, b, gamma, beta, stride=s, padding=p)
        out = jax.block_until_ready(out)

        ref = ref_conv_gn_silu(x, w, b, gamma, beta, stride=s, padding=p)
        # Kernel matmul runs with bf16 operands (f32 accumulate) and SiLU uses
        # the approximate EUP reciprocal; tolerance set vs. the f32 HIGHEST
        # reference accordingly.
        np.testing.assert_allclose(np.asarray(out), np.asarray(ref),
                                   rtol=5e-2, atol=5e-2)

        ho = (H + 2 * p - k) // s + 1
        wo = (W + 2 * p - k) // s + 1
        assert out.shape == (N, c_out, ho, wo)

    print("KERNEL_OK")
</pallas_src>

<mosaic_0001>
module attributes {stable_mosaic.version = 11 : i64} {
  func.func @conv_gn_silu_kernel(%arg0: i32, %arg1: i32, %arg2: memref<1x8x384xf32, #tpu.memory_space<vmem>>, %arg3: memref<32x72xf32, #tpu.memory_space<vmem>>, %arg4: memref<32x3xf32, #tpu.memory_space<vmem>>, %arg5: memref<1x32x288xf32, #tpu.memory_space<vmem>>) attributes {dimension_semantics = [#tpu.dimension_semantics<parallel>, #tpu.dimension_semantics<parallel>], iteration_bounds = array<i64: 2, 1>, scalar_prefetch = 0 : i64, scratch_operands = 0 : i64, tpu.core_type = #tpu.core_type<tc>, window_params = [{transform_indices = @transform_0, window_bounds = array<i64: 1, 8, 384>}, {transform_indices = @transform_1, window_bounds = array<i64: 32, 72>}, {transform_indices = @transform_2, window_bounds = array<i64: 32, 3>}, {transform_indices = @transform_3, window_bounds = array<i64: 1, 32, 288>}]} {
    %c0 = arith.constant 0 : index
    %c0_0 = arith.constant 0 : index
    %c0_1 = arith.constant 0 : index
    %0 = vector.load %arg2[%c0, %c0_0, %c0_1] : memref<1x8x384xf32, #tpu.memory_space<vmem>>, vector<1x8x288xf32>
    %1 = vector.shape_cast %0 : vector<1x8x288xf32> to vector<8x288xf32>
    %c0_2 = arith.constant 0 : index
    %c0_3 = arith.constant 0 : index
    %c1 = arith.constant 1 : index
    %2 = vector.load %arg2[%c0_2, %c0_3, %c1] : memref<1x8x384xf32, #tpu.memory_space<vmem>>, vector<1x8x288xf32>
    %3 = vector.shape_cast %2 : vector<1x8x288xf32> to vector<8x288xf32>
    %c0_4 = arith.constant 0 : index
    %c0_5 = arith.constant 0 : index
    %c2 = arith.constant 2 : index
    %4 = vector.load %arg2[%c0_4, %c0_5, %c2] : memref<1x8x384xf32, #tpu.memory_space<vmem>>, vector<1x8x288xf32>
    %5 = vector.shape_cast %4 : vector<1x8x288xf32> to vector<8x288xf32>
    %c0_6 = arith.constant 0 : index
    %c0_7 = arith.constant 0 : index
    %c18 = arith.constant 18 : index
    %6 = vector.load %arg2[%c0_6, %c0_7, %c18] : memref<1x8x384xf32, #tpu.memory_space<vmem>>, vector<1x8x288xf32>
    %7 = vector.shape_cast %6 : vector<1x8x288xf32> to vector<8x288xf32>
    %c0_8 = arith.constant 0 : index
    %c0_9 = arith.constant 0 : index
    %c19 = arith.constant 19 : index
    %8 = vector.load %arg2[%c0_8, %c0_9, %c19] : memref<1x8x384xf32, #tpu.memory_space<vmem>>, vector<1x8x288xf32>
    %9 = vector.shape_cast %8 : vector<1x8x288xf32> to vector<8x288xf32>
    %c0_10 = arith.constant 0 : index
    %c0_11 = arith.constant 0 : index
    %c20 = arith.constant 20 : index
    %10 = vector.load %arg2[%c0_10, %c0_11, %c20] : memref<1x8x384xf32, #tpu.memory_space<vmem>>, vector<1x8x288xf32>
    %11 = vector.shape_cast %10 : vector<1x8x288xf32> to vector<8x288xf32>
    %c0_12 = arith.constant 0 : index
    %c0_13 = arith.constant 0 : index
    %c36 = arith.constant 36 : index
    %12 = vector.load %arg2[%c0_12, %c0_13, %c36] : memref<1x8x384xf32, #tpu.memory_space<vmem>>, vector<1x8x288xf32>
    %13 = vector.shape_cast %12 : vector<1x8x288xf32> to vector<8x288xf32>
    %c0_14 = arith.constant 0 : index
    %c0_15 = arith.constant 0 : index
    %c37 = arith.constant 37 : index
    %14 = vector.load %arg2[%c0_14, %c0_15, %c37] : memref<1x8x384xf32, #tpu.memory_space<vmem>>, vector<1x8x288xf32>
    %15 = vector.shape_cast %14 : vector<1x8x288xf32> to vector<8x288xf32>
    %c0_16 = arith.constant 0 : index
    %c0_17 = arith.constant 0 : index
    %c38 = arith.constant 38 : index
    %16 = vector.load %arg2[%c0_16, %c0_17, %c38] : memref<1x8x384xf32, #tpu.memory_space<vmem>>, vector<1x8x288xf32>
    %17 = vector.shape_cast %16 : vector<1x8x288xf32> to vector<8x288xf32>
    %18 = tpu.concatenate %1, %3, %5, %7, %9, %11, %13, %15, %17 in 0 : vector<8x288xf32>, vector<8x288xf32>, vector<8x288xf32>, vector<8x288xf32>, vector<8x288xf32>, vector<8x288xf32>, vector<8x288xf32>, vector<8x288xf32>, vector<8x288xf32> -> vector<72x288xf32>
    %c0_18 = arith.constant 0 : index
    %c0_19 = arith.constant 0 : index
    %19 = vector.load %arg3[%c0_18, %c0_19] : memref<32x72xf32, #tpu.memory_space<vmem>>, vector<32x72xf32>
    %20 = arith.truncf %19 : vector<32x72xf32> to vector<32x72xbf16>
    %21 = arith.truncf %18 : vector<72x288xf32> to vector<72x288xbf16>
    %cst = arith.constant dense<0.000000e+00> : vector<32x288xf32>
    %22 = tpu.matmul %20, %21, %cst {dimension_numbers = #tpu.dot_dimension_numbers<[1], [0], [0], [1], [0, 0, 1, 1], [], []>} : vector<32x72xbf16>, vector<72x288xbf16>, vector<32x288xf32> -> vector<32x288xf32>
    %c0_20 = arith.constant 0 : index
    %c0_21 = arith.constant 0 : index
    %23 = vector.load %arg4[%c0_20, %c0_21] : memref<32x3xf32, #tpu.memory_space<vmem>>, vector<32x1xf32>
    %24 = vector.broadcast %23 : vector<32x1xf32> to vector<32x288xf32>
    %25 = arith.addf %22, %24 : vector<32x288xf32>
    %26 = tpu.iota {dimensions = array<i32: 1>} : vector<1x288xi32>
    %c18_i32 = arith.constant 18 : i32
    %c0_i32 = arith.constant 0 : i32
    %27 = arith.cmpi eq, %c18_i32, %c0_i32 : i32
    %c1_i32 = arith.constant 1 : i32
    %28 = arith.select %27, %c1_i32, %c18_i32 : i32
    %29 = vector.broadcast %28 : i32 to vector<1x288xi32>
    %30 = arith.remsi %26, %29 : vector<1x288xi32>
    %c0_i32_22 = arith.constant 0 : i32
    %31 = vector.broadcast %c0_i32_22 : i32 to vector<1x288xi32>
    %32 = arith.cmpi ne, %30, %31 : vector<1x288xi32>
    %c0_i32_23 = arith.constant 0 : i32
    %33 = vector.broadcast %c0_i32_23 : i32 to vector<1x288xi32>
    %34 = arith.cmpi slt, %30, %33 : vector<1x288xi32>
    %c0_i32_24 = arith.constant 0 : i32
    %35 = arith.cmpi slt, %28, %c0_i32_24 : i32
    %36 = vector.broadcast %35 : i1 to vector<1x288xi1>
    %37 = vector.broadcast %36 : vector<1x288xi1> to vector<1x288xi1>
    %38 = arith.xori %34, %37 : vector<1x288xi1>
    %39 = arith.andi %38, %32 : vector<1x288xi1>
    %40 = vector.broadcast %28 : i32 to vector<1x288xi32>
    %41 = arith.addi %30, %40 : vector<1x288xi32>
    %42 = arith.select %39, %41, %30 : vector<1x288xi1>, vector<1x288xi32>
    %c16_i32 = arith.constant 16 : i32
    %43 = vector.broadcast %c16_i32 : i32 to vector<1x288xi32>
    %44 = arith.cmpi slt, %42, %43 : vector<1x288xi32>
    %45 = arith.extui %44 : vector<1x288xi1> to vector<1x288xi32>
    %46 = arith.sitofp %45 : vector<1x288xi32> to vector<1x288xf32>
    %47 = vector.broadcast %46 : vector<1x288xf32> to vector<32x288xf32>
    %48 = arith.mulf %25, %47 : vector<32x288xf32>
    %cst_25 = arith.constant dense<0.000000e+00> : vector<32xf32>
    %49 = vector.multi_reduction <add>, %48, %cst_25 [1] : vector<32x288xf32> to vector<32xf32>
    %50 = vector.shape_cast %49 : vector<32xf32> to vector<32x1xf32>
    %51 = vector.shape_cast %50 : vector<32x1xf32> to vector<4x8x1xf32>
    %cst_26 = arith.constant dense<0.000000e+00> : vector<4x1xf32>
    %52 = vector.multi_reduction <add>, %51, %cst_26 [1] : vector<4x8x1xf32> to vector<4x1xf32>
    %53 = vector.shape_cast %52 : vector<4x1xf32> to vector<4x1x1xf32>
    %cst_27 = arith.constant 2.048000e+03 : f32
    %54 = vector.broadcast %cst_27 : f32 to vector<4x1x1xf32>
    %55 = arith.divf %53, %54 : vector<4x1x1xf32>
    %56 = vector.shape_cast %55 : vector<4x1x1xf32> to vector<4x1x1xf32>
    %57 = vector.broadcast %56 : vector<4x1x1xf32> to vector<4x8x1xf32>
    %58 = vector.shape_cast %57 : vector<4x8x1xf32> to vector<32x1xf32>
    %59 = vector.broadcast %58 : vector<32x1xf32> to vector<32x288xf32>
    %60 = arith.subf %25, %59 : vector<32x288xf32>
    %61 = vector.broadcast %46 : vector<1x288xf32> to vector<32x288xf32>
    %62 = arith.mulf %60, %61 : vector<32x288xf32>
    %63 = arith.mulf %62, %62 : vector<32x288xf32>
    %cst_28 = arith.constant dense<0.000000e+00> : vector<32xf32>
    %64 = vector.multi_reduction <add>, %63, %cst_28 [1] : vector<32x288xf32> to vector<32xf32>
    %65 = vector.shape_cast %64 : vector<32xf32> to vector<32x1xf32>
    %66 = vector.shape_cast %65 : vector<32x1xf32> to vector<4x8x1xf32>
    %cst_29 = arith.constant dense<0.000000e+00> : vector<4x1xf32>
    %67 = vector.multi_reduction <add>, %66, %cst_29 [1] : vector<4x8x1xf32> to vector<4x1xf32>
    %68 = vector.shape_cast %67 : vector<4x1xf32> to vector<4x1x1xf32>
    %cst_30 = arith.constant 2.048000e+03 : f32
    %69 = vector.broadcast %cst_30 : f32 to vector<4x1x1xf32>
    %70 = arith.divf %68, %69 : vector<4x1x1xf32>
    %cst_31 = arith.constant 9.99999974E-6 : f32
    %71 = vector.broadcast %cst_31 : f32 to vector<4x1x1xf32>
    %72 = arith.addf %70, %71 : vector<4x1x1xf32>
    %73 = math.rsqrt %72 : vector<4x1x1xf32>
    %74 = vector.shape_cast %73 : vector<4x1x1xf32> to vector<4x1x1xf32>
    %75 = vector.broadcast %74 : vector<4x1x1xf32> to vector<4x8x1xf32>
    %76 = vector.shape_cast %75 : vector<4x8x1xf32> to vector<32x1xf32>
    %c0_32 = arith.constant 0 : index
    %c1_33 = arith.constant 1 : index
    %77 = vector.load %arg4[%c0_32, %c1_33] : memref<32x3xf32, #tpu.memory_space<vmem>>, vector<32x1xf32>
    %78 = arith.mulf %77, %76 : vector<32x1xf32>
    %c0_34 = arith.constant 0 : index
    %c2_35 = arith.constant 2 : index
    %79 = vector.load %arg4[%c0_34, %c2_35] : memref<32x3xf32, #tpu.memory_space<vmem>>, vector<32x1xf32>
    %80 = arith.mulf %58, %78 : vector<32x1xf32>
    %81 = arith.subf %79, %80 : vector<32x1xf32>
    %82 = vector.broadcast %78 : vector<32x1xf32> to vector<32x288xf32>
    %83 = arith.mulf %25, %82 : vector<32x288xf32>
    %84 = vector.broadcast %81 : vector<32x1xf32> to vector<32x288xf32>
    %85 = arith.addf %83, %84 : vector<32x288xf32>
    %cst_36 = arith.constant 0.000000e+00 : f32
    %86 = vector.broadcast %cst_36 : f32 to vector<32x288xf32>
    %87 = arith.subf %86, %85 : vector<32x288xf32>
    %88 = math.exp %87 : vector<32x288xf32>
    %cst_37 = arith.constant 1.000000e+00 : f32
    %89 = vector.broadcast %cst_37 : f32 to vector<32x288xf32>
    %90 = arith.addf %89, %88 : vector<32x288xf32>
    %91 = tpu.reciprocal %90 {approx = true} : vector<32x288xf32> -> vector<32x288xf32>
    %92 = arith.mulf %85, %91 : vector<32x288xf32>
    %c0_38 = arith.constant 0 : index
    %c0_39 = arith.constant 0 : index
    %c0_40 = arith.constant 0 : index
    %93 = vector.load %arg5[%c0_38, %c0_39, %c0_40] : memref<1x32x288xf32, #tpu.memory_space<vmem>>, vector<1x32x288xf32>
    %94 = vector.shape_cast %93 : vector<1x32x288xf32> to vector<32x288xf32>
    %95 = vector.shape_cast %92 : vector<32x288xf32> to vector<1x32x288xf32>
    tpu.vector_store %arg5[%c0_38, %c0_39, %c0_40], %95 {strides = array<i32>} : memref<1x32x288xf32, #tpu.memory_space<vmem>>, vector<1x32x288xf32>,
    return
  }
  func.func @transform_0(%arg0: i32, %arg1: i32) -> (i32, i32, i32) {
    %c0_i32 = arith.constant 0 : i32
    %c0_i32_0 = arith.constant 0 : i32
    %c0_i32_1 = arith.constant 0 : i32
    return %arg0, %c0_i32, %c0_i32_0 : i32, i32, i32
  }
  func.func @transform_1(%arg0: i32, %arg1: i32) -> (i32, i32) {
    %c0_i32 = arith.constant 0 : i32
    %c0_i32_0 = arith.constant 0 : i32
    return %arg1, %c0_i32 : i32, i32
  }
  func.func @transform_2(%arg0: i32, %arg1: i32) -> (i32, i32) {
    %c0_i32 = arith.constant 0 : i32
    %c0_i32_0 = arith.constant 0 : i32
    return %arg1, %c0_i32 : i32, i32
  }
  func.func @transform_3(%arg0: i32, %arg1: i32) -> (i32, i32, i32) {
    %c0_i32 = arith.constant 0 : i32
    %c0_i32_0 = arith.constant 0 : i32
    return %arg0, %arg1, %c0_i32 : i32, i32, i32
  }
}

</mosaic_0001>

<llo_original>
// kernel: tpu_custom_call.1
$region0: #{tpu_custom_call.1}
  #allocation0 [shape = 'u32[]', space=smem, size = 0x4, offset = 0x4, fixed_abs, tag = 'smem constant byte address 0x4 - core index']
  #allocation1 [shape = 'u32[72,128]{1,0:T(1,128)}', space=vmem, size = 0x9000, scoped, tag = 'internal scratch']
  %s0 = inlined_call_operand.hbm [shape: f32[2,8,384], index: 0, kind: input, shape index: {}]
  %s1 = inlined_call_operand.vmem [shape: f32[32,72], index: 1, kind: input, shape index: {}]
  %s2 = inlined_call_operand.vmem [shape: f32[32,3], index: 2, kind: input, shape index: {}]
  %s3 = inlined_call_operand.hbm [shape: f32[2,32,288], index: 3, kind: output, shape index: {}]
  %s4 = sld [smem:[#allocation0]]
  $region49: #{tpu_custom_call.1} parent=0
    _
  %s6 = ssub.s32 1, %s4
  %s7 = scalar_select 0, %s6, %s4
  $region1: #{tpu_custom_call.1} parent=0
    #allocation2 [shape = 'u8[24576]{0}', space=vmem, size = 0x6000, scoped, tag = 'input window, operand 0']
    #allocation3 [shape = 's32[2]{0}', space=sflag, size = 0x8, scoped, tag = 'scoped memory for tpu_custom_call.1']
    #allocation4 [shape = 's32[2]{0}', space=sflag, size = 0x8, scoped, tag = 'scoped memory for tpu_custom_call.1']
    #allocation5 [shape = 'u8[98304]{0}', space=vmem, size = 0x18000, scoped, tag = 'output window, operand 0']
    %8 = vsyncpa [#allocation3], 0
    %s9 = scalar_lea.sflag [#allocation3], 1
    %10 = vsyncpa %s9, 0
    %11 = vsyncpa [#allocation4], 0
    %s12 = scalar_lea.sflag [#allocation4], 1
    %13 = vsyncpa %s12, 0
    loop: start=0, step=1, limit=4
    $region2: #{tpu_custom_call.1} parent=1 // loop_pre_header
      _
    $region3: #{tpu_custom_call.1} parent=1 // loop_header
      %s15 = sphi 0, %s19
      %p16 = scmp.ge.s32.totalorder %s15, 4
      %s22 = sphi 0, %s34
      %s23 = sphi 0, %s30
      %s24 = sphi 0, %s22
      %s25 = sphi 0, %s23
      %s26 = sphi 0, %s24
      %s27 = sphi 0, %s25
      %s37 = sphi 0, %s39
      %s40 = sphi 0, %s37
      %s41 = sphi 0, %s40
      %s57 = sphi 0, %s41
      %s63 = sphi 0, %s65
      %s66 = sphi 0, %s63
      %s67 = sphi 0, %s66
      %s83 = sphi 0, %s67
      %s89 = sphi 0, %s91
      %s92 = sphi 0, %s89
      %s93 = sphi 0, %s92
      %s109 = sphi 0, %s93
      %s117 = sphi 0, %s119
      %s120 = sphi 0, %s117
      %s121 = sphi 0, %s120
      %s137 = sphi 0, %s121
    $region4: #{tpu_custom_call.1} parent=1 // loop_header_branch
      %18 = sbr.rel (%p16) target = $region8
    $region5: #{tpu_custom_call.1} parent=1 // loop_body
      %s20 = ssub.s32 %s15, 1
      %s21 = ssub.s32 %s15, 2
      %s28 = sadd.s32 1, %s23
      %p29 = scmp.ge.s32.totalorder %s28, 1
      %s30 = scalar_select %p29, 0, %s28
      %s31 = sadd.s32 1, %s22
      %s32 = scalar_select %p29, %s31, %s22
      %p33 = scmp.ge.s32.totalorder %s32, 2
      %s34 = scalar_select %p33, 0, %s32
      %s35 = ssub.s32 %s22, %s34
      %p36 = scmp.eq.s32.totalorder %s35, 0
      %s38 = sadd.s32 %s37, 1
      %s39 = scalar_select %p36, %s37, %s38
      %p42 = pneg %p36
      %p43 = scmp.eq.s32.totalorder %s15, 1
      %p44 = por %p42, %p43
      %p45 = scmp.ne.s32.totalorder %s37, %s40
      %p46 = scmp.eq.s32.totalorder %s15, 0
      %p47 = por %p45, %p46
      %p48 = scmp.ne.s32.totalorder %s37, %s40
      %p49 = scmp.eq.s32.totalorder %s20, 1
      %p50 = por %p48, %p49
      %p51 = scmp.ne.s32.totalorder %s40, %s41
      %p52 = scmp.eq.s32.totalorder %s20, 0
      %p53 = por %p51, %p52
      %p54 = scmp.ne.s32.totalorder %s40, %s41
      %p55 = scmp.eq.s32.totalorder %s21, 1
      %p56 = por %p54, %p55
      %p58 = scmp.ne.s32.totalorder %s41, %s57
      %p59 = scmp.eq.s32.totalorder %s21, 0
      %p60 = por %p58, %p59
      %s61 = ssub.s32 %s23, %s30
      %p62 = scmp.eq.s32.totalorder %s61, 0
      %s64 = sadd.s32 %s63, 1
      %s65 = scalar_select %p62, %s63, %s64
      %p68 = pneg %p62
      %p69 = scmp.eq.s32.totalorder %s15, 1
      %p70 = por %p68, %p69
      %p71 = scmp.ne.s32.totalorder %s63, %s66
      %p72 = scmp.eq.s32.totalorder %s15, 0
      %p73 = por %p71, %p72
      %p74 = scmp.ne.s32.totalorder %s63, %s66
      %p75 = scmp.eq.s32.totalorder %s20, 1
      %p76 = por %p74, %p75
      %p77 = scmp.ne.s32.totalorder %s66, %s67
      %p78 = scmp.eq.s32.totalorder %s20, 0
      %p79 = por %p77, %p78
      %p80 = scmp.ne.s32.totalorder %s66, %s67
      %p81 = scmp.eq.s32.totalorder %s21, 1
      %p82 = por %p80, %p81
      %p84 = scmp.ne.s32.totalorder %s67, %s83
      %p85 = scmp.eq.s32.totalorder %s21, 0
      %p86 = por %p84, %p85
      %s87 = ssub.s32 %s23, %s30
      %p88 = scmp.eq.s32.totalorder %s87, 0
      %s90 = sadd.s32 %s89, 1
      %s91 = scalar_select %p88, %s89, %s90
      %p94 = pneg %p88
      %p95 = scmp.eq.s32.totalorder %s15, 1
      %p96 = por %p94, %p95
      %p97 = scmp.ne.s32.totalorder %s89, %s92
      %p98 = scmp.eq.s32.totalorder %s15, 0
      %p99 = por %p97, %p98
      %p100 = scmp.ne.s32.totalorder %s89, %s92
      %p101 = scmp.eq.s32.totalorder %s20, 1
      %p102 = por %p100, %p101
      %p103 = scmp.ne.s32.totalorder %s92, %s93
      %p104 = scmp.eq.s32.totalorder %s20, 0
      %p105 = por %p103, %p104
      %p106 = scmp.ne.s32.totalorder %s92, %s93
      %p107 = scmp.eq.s32.totalorder %s21, 1
      %p108 = por %p106, %p107
      %p110 = scmp.ne.s32.totalorder %s93, %s109
      %p111 = scmp.eq.s32.totalorder %s21, 0
      %p112 = por %p110, %p111
      %s113 = ssub.s32 %s22, %s34
      %s114 = ssub.s32 %s23, %s30
      %s115 = sor.u32 %s113, %s114
      %p116 = scmp.eq.s32.totalorder %s115, 0
      %s118 = sadd.s32 %s117, 1
      %s119 = scalar_select %p116, %s117, %s118
      %p122 = pneg %p116
      %p123 = scmp.eq.s32.totalorder %s15, 1
      %p124 = por %p122, %p123
      %p125 = scmp.ne.s32.totalorder %s117, %s120
      %p126 = scmp.eq.s32.totalorder %s15, 0
      %p127 = por %p125, %p126
      %p128 = scmp.ne.s32.totalorder %s117, %s120
      %p129 = scmp.eq.s32.totalorder %s20, 1
      %p130 = por %p128, %p129
      %p131 = scmp.ne.s32.totalorder %s120, %s121
      %p132 = scmp.eq.s32.totalorder %s20, 0
      %p133 = por %p131, %p132
      %p134 = scmp.ne.s32.totalorder %s120, %s121
      %p135 = scmp.eq.s32.totalorder %s21, 1
      %p136 = por %p134, %p135
      %p138 = scmp.ne.s32.totalorder %s121, %s137
      %p139 = scmp.eq.s32.totalorder %s21, 0
      %p140 = por %p138, %p139
      %p141 = scmp.le.s32.totalorder 1, %s15
      %p142 = scmp.lt.s32.totalorder %s15, 3
      %p143 = pnand %p141, %p142
      %p144 = pneg %p143
      // Predicated region
      $region9: #{tpu_custom_call.1} parent=5 // pred_check
        _
      $region10: #{tpu_custom_call.1} parent=5 // pred_check_branch
        %146 = sbr.rel (%p143) target = $region12
      $region11: #{tpu_custom_call.1} parent=5 // pred_region
        %s147 = ssub.s32 %s15, 1
        // Predicated region
        $region13: #{tpu_custom_call.1} parent=11 // pred_check
          %p148 = pneg %p79
        $region14: #{tpu_custom_call.1} parent=11 // pred_check_branch
          %150 = sbr.rel (%p148) target = $region16
        $region15: #{tpu_custom_call.1} parent=11 // pred_region
          %s151 = smul.u32 4, %s25
          %p152 = scmp.lt.s32.totalorder %s151, 3
          %s153 = scalar_select %p152, %s151, 3
          %s154 = smul.addr %s153, 8
          %s155 = scalar_lea.vmem %s1, %s154
          %s156 = smul.u32 4, %s25
        $region16: #{tpu_custom_call.1} parent=11 // pred_fallthru
          _
        // Predicated region
        $region17: #{tpu_custom_call.1} parent=11 // pred_check
          %p157 = pneg %p105
        $region18: #{tpu_custom_call.1} parent=11 // pred_check_branch
          %159 = sbr.rel (%p157) target = $region20
        $region19: #{tpu_custom_call.1} parent=11 // pred_region
          %s160 = smul.u32 4, %s25
          %p161 = scmp.lt.s32.totalorder %s160, 3
          %s162 = scalar_select %p161, %s160, 3
          %s163 = smul.addr %s162, 8
          %s164 = scalar_lea.vmem %s2, %s163
          %s165 = smul.u32 4, %s25
        $region20: #{tpu_custom_call.1} parent=11 // pred_fallthru
          _
      $region12: #{tpu_custom_call.1} parent=5 // pred_fallthru
        _
      %p166 = scmp.lt.s32.totalorder %s15, 2
      // Predicated region
      $region21: #{tpu_custom_call.1} parent=5 // pred_check
        %p167 = pneg %p166
      $region22: #{tpu_custom_call.1} parent=5 // pred_check_branch
        %169 = sbr.rel (%p167) target = $region24
      $region23: #{tpu_custom_call.1} parent=5 // pred_region
        // Predicated region
        $region25: #{tpu_custom_call.1} parent=23 // pred_check
          %p170 = pneg %p47
        $region26: #{tpu_custom_call.1} parent=23 // pred_check_branch
          %172 = sbr.rel (%p170) target = $region28
        $region27: #{tpu_custom_call.1} parent=23 // pred_region
          %s173 = sand.u32 %s37, 1
          %s174 = scalar_lea.sflag [#allocation3], %s173
          %s175 = sand.u32 %s37, 1
          %s176 = smul.addr %s175, 24
          %s177 = scalar_lea.vmem [#allocation2], %s176
          %179 = vsyncadd %s174, 0
          %s180 = smul.addr %s22, 3
          %s181 = smul.addr %s180, 8
          %s182 = scalar_lea.hbm %s0, %s181
          %s184 = sshll.u32 %s182, 4
          %s185 = int_to_ptr.hbm [resolvable:$true] %s184
          %s186 = sshll.u32 %s177, 4
          %s187 = int_to_ptr.vmem [resolvable:$true] %s186
          %189 = dma.hbm_to_vmem [thread:$0]  %s185, 384, %s187, %s174
        $region28: #{tpu_custom_call.1} parent=23 // pred_fallthru
          _
      $region24: #{tpu_custom_call.1} parent=5 // pred_fallthru
        _
      %p190 = scmp.le.s32.totalorder 1, %s15
      %p191 = scmp.lt.s32.totalorder %s15, 3
      %p192 = pnand %p190, %p191
      %p193 = pneg %p192
      // Predicated region
      $region29: #{tpu_custom_call.1} parent=5 // pred_check
        _
      $region30: #{tpu_custom_call.1} parent=5 // pred_check_branch
        %195 = sbr.rel (%p192) target = $region32
      $region31: #{tpu_custom_call.1} parent=5 // pred_region
        %s196 = ssub.s32 %s15, 1
        %s197 = sand.u32 %s40, 1
        %s198 = scalar_lea.sflag [#allocation3], %s197
        %s199 = sand.u32 %s40, 1
        %s200 = smul.addr %s199, 24
        %s201 = scalar_lea.vmem [#allocation2], %s200
        // Predicated region
        $region33: #{tpu_custom_call.1} parent=31 // pred_check
          %p202 = pneg %p53
        $region34: #{tpu_custom_call.1} parent=31 // pred_check_branch
          %204 = sbr.rel (%p202) target = $region36
        $region35: #{tpu_custom_call.1} parent=31 // pred_region
          %206 = dma.done %s198, 384
        $region36: #{tpu_custom_call.1} parent=31 // pred_fallthru
          _
        %s207 = sand.u32 %s40, 1
        %s208 = scalar_lea.sflag [#allocation3], %s207
        %s209 = sand.u32 %s40, 1
        %s210 = smul.addr %s209, 24
        %s211 = scalar_lea.vmem [#allocation2], %s210
        %p212 = pneg %p53
        %p213 = pneg %p50
        %s214 = smul.u32 4, %s25
        %p215 = scmp.lt.s32.totalorder %s214, 3
        %s216 = scalar_select %p215, %s214, 3
        %s217 = smul.addr %s216, 8
        %s218 = scalar_lea.vmem %s1, %s217
        %p219 = pneg %p79
        %p220 = pneg %p76
        %s221 = smul.u32 4, %s25
        %p222 = scmp.lt.s32.totalorder %s221, 3
        %s223 = scalar_select %p222, %s221, 3
        %s224 = smul.addr %s223, 8
        %s225 = scalar_lea.vmem %s2, %s224
        %p226 = pneg %p105
        %p227 = pneg %p102
        %p228 = pneg %p133
        %p229 = pneg %p130
        %s230 = sand.u32 %s120, 1
        %s231 = scalar_lea.sflag [#allocation4], %s230
        %s232 = sand.u32 %s120, 1
        %s233 = smul.addr %s232, 96
        %s234 = scalar_lea.vmem [#allocation5], %s233
        %s235 = smul.u32 4, %s25
        %p236 = scmp.lt.s32.totalorder %s235, 3
        %s237 = scalar_select %p236, %s235, 3
        %s238 = smul.addr %s237, 8
        %s239 = scalar_lea.vmem %s1, %s238
        %s240 = smul.u32 4, %s25
        %s241 = smul.u32 4, %s25
        %p242 = scmp.lt.s32.totalorder %s241, 3
        %s243 = scalar_select %p242, %s241, 3
        %s244 = smul.addr %s243, 8
        %s245 = scalar_lea.vmem %s2, %s244
        %s246 = smul.u32 4, %s25
        %s247 = smul.u32 4, %s25
        %v249 = vld [vmem:[%s201] sm:$0xff]
        %v250 = vld [vmem:[%s201 + $0x8] sm:$0xff]
        %v251 = vld [vmem:[%s201 + $0x10] sm:$0xff]
        %255 = vrot.lane.b32.xlu0 %v249, 127
        %v256 = vpop.permute.xlu0 %255
        %257 = vrot.lane.b32.xlu0 %v250, 127
        %v258 = vpop.permute.xlu0 %257
        %259 = vrot.lane.b32.xlu0 %v251, 127
        %v260 = vpop.permute.xlu0 %259
        %vm261 = vcmask 1039360
        %v262 = vsel %vm261, %v256, %v258
        %v263 = vsel %vm261, %v258, %v260
        %267 = vrot.lane.b32.xlu0 %v249, 126
        %v268 = vpop.permute.xlu0 %267
        %269 = vrot.lane.b32.xlu0 %v250, 126
        %v270 = vpop.permute.xlu0 %269
        %271 = vrot.lane.b32.xlu0 %v251, 126
        %v272 = vpop.permute.xlu0 %271
        %vm273 = vcmask 1031168
        %v274 = vsel %vm273, %v268, %v270
        %v275 = vsel %vm273, %v270, %v272
        %279 = vrot.lane.b32.xlu0 %v249, 110
        %v280 = vpop.permute.xlu0 %279
        %281 = vrot.lane.b32.xlu0 %v250, 110
        %v282 = vpop.permute.xlu0 %281
        %283 = vrot.lane.b32.xlu0 %v251, 110
        %v284 = vpop.permute.xlu0 %283
        %vm285 = vcmask 900096
        %v286 = vsel %vm285, %v280, %v282
        %v287 = vsel %vm285, %v282, %v284
        %291 = vrot.lane.b32.xlu0 %v249, 109
        %v292 = vpop.permute.xlu0 %291
        %293 = vrot.lane.b32.xlu0 %v250, 109
        %v294 = vpop.permute.xlu0 %293
        %295 = vrot.lane.b32.xlu0 %v251, 109
        %v296 = vpop.permute.xlu0 %295
        %vm297 = vcmask 891904
        %v298 = vsel %vm297, %v292, %v294
        %v299 = vsel %vm297, %v294, %v296
        %303 = vrot.lane.b32.xlu0 %v249, 108
        %v304 = vpop.permute.xlu0 %303
        %305 = vrot.lane.b32.xlu0 %v250, 108
        %v306 = vpop.permute.xlu0 %305
        %307 = vrot.lane.b32.xlu0 %v251, 108
        %v308 = vpop.permute.xlu0 %307
        %vm309 = vcmask 883712
        %v310 = vsel %vm309, %v304, %v306
        %v311 = vsel %vm309, %v306, %v308
        %315 = vrot.lane.b32.xlu0 %v249, 92
        %v316 = vpop.permute.xlu0 %315
        %317 = vrot.lane.b32.xlu0 %v250, 92
        %v318 = vpop.permute.xlu0 %317
        %319 = vrot.lane.b32.xlu0 %v251, 92
        %v320 = vpop.permute.xlu0 %319
        %vm321 = vcmask 752640
        %v322 = vsel %vm321, %v316, %v318
        %v323 = vsel %vm321, %v318, %v320
        %327 = vrot.lane.b32.xlu0 %v249, 91
        %v328 = vpop.permute.xlu0 %327
        %329 = vrot.lane.b32.xlu0 %v250, 91
        %v330 = vpop.permute.xlu0 %329
        %331 = vrot.lane.b32.xlu0 %v251, 91
        %v332 = vpop.permute.xlu0 %331
        %vm333 = vcmask 744448
        %v334 = vsel %vm333, %v328, %v330
        %v335 = vsel %vm333, %v330, %v332
        %339 = vrot.lane.b32.xlu0 %v249, 90
        %v340 = vpop.permute.xlu0 %339
        %341 = vrot.lane.b32.xlu0 %v250, 90
        %v342 = vpop.permute.xlu0 %341
        %343 = vrot.lane.b32.xlu0 %v251, 90
        %v344 = vpop.permute.xlu0 %343
        %vm345 = vcmask 736256
        %v346 = vsel %vm345, %v340, %v342
        %v347 = vsel %vm345, %v342, %v344
        %v351 = vld [vmem:[%s239] sm:$0xff]
        %v352 = vld [vmem:[%s239 + $0x8] sm:$0xff]
        %v353 = vld [vmem:[%s239 + $0x10] sm:$0xff]
        %v354 = vld [vmem:[%s239 + $0x18] sm:$0xff]
        %v355 = vpack.c.bf16 %v352, %v351
        %v356 = vpack.c.bf16 %v354, %v353
        %v357 = vpack.c.bf16 %v262, %v249
        %v358 = vpack.c.bf16 %v263, %v250
        %v359 = vpack.c.bf16 %v260, %v251
        %v360 = vpack.c.bf16 %v286, %v274
        %v361 = vpack.c.bf16 %v287, %v275
        %v362 = vpack.c.bf16 %v284, %v272
        %v363 = vpack.c.bf16 %v310, %v298
        %v364 = vpack.c.bf16 %v311, %v299
        %v365 = vpack.c.bf16 %v308, %v296
        %v366 = vpack.c.bf16 %v334, %v322
        %v367 = vpack.c.bf16 %v335, %v323
        %v368 = vpack.c.bf16 %v332, %v320
        %v369 = vpack.c.bf16 %v346, %v346
        %v370 = vpack.c.bf16 %v347, %v347
        %v371 = vpack.c.bf16 %v344, %v344
        %v372 = vld [vmem:[%s245] sm:$0xff]
        %v373 = vld [vmem:[%s245 + $0x8] sm:$0xff]
        %v374 = vld [vmem:[%s245 + $0x10] sm:$0xff]
        %v375 = vld [vmem:[%s245 + $0x18] sm:$0xff]
        %377 = vset.pattern.permute.xlu0 0
        %378 = vperm.xlu0 %377, %v372
        %v379 = vpop.permute.xlu0 %378
        %382 = vset.pattern.permute.xlu0 0
        %383 = vperm.xlu0 %382, %v373
        %v384 = vpop.permute.xlu0 %383
        %387 = vset.pattern.permute.xlu0 0
        %388 = vperm.xlu0 %387, %v374
        %v389 = vpop.permute.xlu0 %388
        %392 = vset.pattern.permute.xlu0 0
        %393 = vperm.xlu0 %392, %v375
        %v394 = vpop.permute.xlu0 %393
        %vm396 = vcmask 588800
        %v398 = vsel %vm396, %v355, 0
        %v401 = vsel %vm396, %v356, 0
        %vm403 = vcmask 1043456
        %v405 = vsel %vm403, %v369, 0
        %v408 = vsel %vm403, %v370, 0
        %v411 = vsel %vm403, %v371, 0
        %413 = vmatpush.bf16.msra.mxu0 0
        %414 = vmatpush.bf16.msra.mxu0 0
        %415 = vmatpush.bf16.msra.mxu0 0
        %416 = vmatpush.bf16.msra.mxu0 %v405
        %417 = vmatpush.bf16.msra.mxu0 %v366
        %418 = vmatpush.bf16.msra.mxu0 %v363
        %419 = vmatpush.bf16.msra.mxu0 %v360
        %420 = vmatpush.bf16.msra.mxu0 %v357
        %421 = vmatmul.bf16.gmra.mxu0 %v398
        %v422 = vpop.f32.mrf.mxu0
        %v423 = vadd.f32 %v379, %v422
        %v424 = vpop.f32.mrf.mxu0
        %v425 = vadd.f32 %v384, %v424
        %426 = vmatmul.bf16.gmra.mxu0 %v401
        %v427 = vpop.f32.mrf.mxu0
        %v428 = vadd.f32 %v389, %v427
        %v429 = vpop.f32.mrf.mxu0
        %v430 = vadd.f32 %v394, %v429
        %431 = vdwg.mxu0
        %432 = vmatpush.bf16.msra.mxu0 0
        %433 = vmatpush.bf16.msra.mxu0 0
        %434 = vmatpush.bf16.msra.mxu0 0
        %435 = vmatpush.bf16.msra.mxu0 %v408
        %436 = vmatpush.bf16.msra.mxu0 %v367
        %437 = vmatpush.bf16.msra.mxu0 %v364
        %438 = vmatpush.bf16.msra.mxu0 %v361
        %439 = vmatpush.bf16.msra.mxu0 %v358
        %440 = vmatmul.bf16.gmra.mxu0 %v398
        %v441 = vpop.f32.mrf.mxu0
        %v442 = vadd.f32 %v379, %v441
        %v443 = vpop.f32.mrf.mxu0
        %v444 = vadd.f32 %v384, %v443
        %445 = vmatmul.bf16.gmra.mxu0 %v401
        %v446 = vpop.f32.mrf.mxu0
        %v447 = vadd.f32 %v389, %v446
        %v448 = vpop.f32.mrf.mxu0
        %v449 = vadd.f32 %v394, %v448
        %450 = vdwg.mxu0
        %451 = vmatpush.bf16.msra.mxu0 0
        %452 = vmatpush.bf16.msra.mxu0 0
        %453 = vmatpush.bf16.msra.mxu0 0
        %454 = vmatpush.bf16.msra.mxu0 %v411
        %455 = vmatpush.bf16.msra.mxu0 %v368
        %456 = vmatpush.bf16.msra.mxu0 %v365
        %457 = vmatpush.bf16.msra.mxu0 %v362
        %458 = vmatpush.bf16.msra.mxu0 %v359
        %459 = vmatmul.bf16.gmra.mxu0 %v398
        %v460 = vpop.f32.mrf.mxu0
        %v461 = vadd.f32 %v379, %v460
        %v462 = vpop.f32.mrf.mxu0
        %v463 = vadd.f32 %v384, %v462
        %464 = vmatmul.bf16.gmra.mxu0 %v401
        %v465 = vpop.f32.mrf.mxu0
        %v466 = vadd.f32 %v389, %v465
        %v467 = vpop.f32.mrf.mxu0
        %v468 = vadd.f32 %v394, %v467
        %469 = vdwg.mxu0
        %v470 = vlaneseq
        %v471 = vand.u32 %v470, 127
        %v472 = vadd.s32 %v471, 128
        %v473 = vadd.s32 %v471, 256
        %vm474 = vcmp.lt.s32.totalorder %v471, 0
        %v475 = vsub.s32 0, %v471
        %v476 = vsel %vm474, %v475, %v471
        %v477 = vand.u32 %v476, 65535
        %v478 = vshrl.u32 %v476, 16
        %v480 = vmul.u32 %v477, 14564
        %v481 = vmul.u32 %v477, 58254
        %v482 = vmul.u32 %v478, 14564
        %v483 = vmul.u32 %v478, 58254
        %v484 = vshll.u32 %v481, 16
        %v485 = vshrl.u32 %v481, 16
        %v486 = vshll.u32 %v482, 16
        %v487 = vshrl.u32 %v482, 16
        %vm488 = vc.u32 %v480, %v484
        %v489 = vsel %vm488, 1, 0
        %v490 = vadd.s32 %v480, %v484
        %v491 = vadd.s32 %v483, %v489
        %vm492 = vc.u32 %v490, %v486
        %v493 = vsel %vm492, 1, 0
        %v494 = vadd.s32 %v490, %v486
        %v495 = vadd.s32 %v491, %v493
        %v496 = vadd.s32 %v495, %v485
        %v497 = vadd.s32 %v496, %v487
        %v498 = vshrl.u32 %v497, 4
        %v499 = vmul.u32 %v498, 18
        %v500 = vsub.s32 %v476, %v499
        %v501 = vsub.s32 0, %v500
        %v502 = vsel %vm474, %v501, %v500
        %vm503 = vcmp.lt.s32.totalorder %v472, 0
        %v504 = vsub.s32 0, %v472
        %v505 = vsel %vm503, %v504, %v472
        %v506 = vand.u32 %v505, 65535
        %v507 = vshrl.u32 %v505, 16
        %v509 = vmul.u32 %v506, 14564
        %v510 = vmul.u32 %v506, 58254
        %v511 = vmul.u32 %v507, 14564
        %v512 = vmul.u32 %v507, 58254
        %v513 = vshll.u32 %v510, 16
        %v514 = vshrl.u32 %v510, 16
        %v515 = vshll.u32 %v511, 16
        %v516 = vshrl.u32 %v511, 16
        %vm517 = vc.u32 %v509, %v513
        %v518 = vsel %vm517, 1, 0
        %v519 = vadd.s32 %v509, %v513
        %v520 = vadd.s32 %v512, %v518
        %vm521 = vc.u32 %v519, %v515
        %v522 = vsel %vm521, 1, 0
        %v523 = vadd.s32 %v519, %v515
        %v524 = vadd.s32 %v520, %v522
        %v525 = vadd.s32 %v524, %v514
        %v526 = vadd.s32 %v525, %v516
        %v527 = vshrl.u32 %v526, 4
        %v528 = vmul.u32 %v527, 18
        %v529 = vsub.s32 %v505, %v528
        %v530 = vsub.s32 0, %v529
        %v531 = vsel %vm503, %v530, %v529
        %vm532 = vcmp.lt.s32.totalorder %v473, 0
        %v533 = vsub.s32 0, %v473
        %v534 = vsel %vm532, %v533, %v473
        %v535 = vand.u32 %v534, 65535
        %v536 = vshrl.u32 %v534, 16
        %v538 = vmul.u32 %v535, 14564
        %v539 = vmul.u32 %v535, 58254
        %v540 = vmul.u32 %v536, 14564
        %v541 = vmul.u32 %v536, 58254
        %v542 = vshll.u32 %v539, 16
        %v543 = vshrl.u32 %v539, 16
        %v544 = vshll.u32 %v540, 16
        %v545 = vshrl.u32 %v540, 16
        %vm546 = vc.u32 %v538, %v542
        %v547 = vsel %vm546, 1, 0
        %v548 = vadd.s32 %v538, %v542
        %v549 = vadd.s32 %v541, %v547
        %vm550 = vc.u32 %v548, %v544
        %v551 = vsel %vm550, 1, 0
        %v552 = vadd.s32 %v548, %v544
        %v553 = vadd.s32 %v549, %v551
        %v554 = vadd.s32 %v553, %v543
        %v555 = vadd.s32 %v554, %v545
        %v556 = vshrl.u32 %v555, 4
        %v557 = vmul.u32 %v556, 18
        %v558 = vsub.s32 %v534, %v557
        %v559 = vsub.s32 0, %v558
        %v560 = vsel %vm532, %v559, %v558
        %vm561 = vcmp.ne.s32.totalorder %v502, 0
        %vm562 = vcmp.ne.s32.totalorder %v531, 0
        %vm563 = vcmp.ne.s32.totalorder %v560, 0
        %vm564 = vcmp.lt.s32.totalorder %v502, 0
        %vm565 = vcmp.lt.s32.totalorder %v531, 0
        %vm566 = vcmp.lt.s32.totalorder %v560, 0
        %vm567 = vmand %vm564, %vm561
        %vm568 = vmand %vm565, %vm562
        %vm569 = vmand %vm566, %vm563
        %v570 = vadd.s32 %v502, 18
        %v571 = vadd.s32 %v531, 18
        %v572 = vadd.s32 %v560, 18
        %v573 = vsel %vm567, %v570, %v502
        %v574 = vsel %vm568, %v571, %v531
        %v575 = vsel %vm569, %v572, %v560
        %vm576 = vcmp.lt.s32.totalorder %v573, 16
        %vm577 = vcmp.lt.s32.totalorder %v574, 16
        %vm578 = vcmp.lt.s32.totalorder %v575, 16
        %v579 = vsel %vm576, 1, 0
        %v580 = vsel %vm577, 1, 0
        %v581 = vsel %vm578, 1, 0
        %v582 = vcvt.s32.f32 %v579
        %v583 = vcvt.s32.f32 %v580
        %v584 = vcvt.s32.f32 %v581
        %v585 = vmul.f32 %v423, %v582
        %v586 = vmul.f32 %v442, %v583
        %v587 = vmul.f32 %v461, %v584
        %v588 = vmul.f32 %v425, %v582
        %v589 = vmul.f32 %v444, %v583
        %v590 = vmul.f32 %v463, %v584
        %v591 = vmul.f32 %v428, %v582
        %v592 = vmul.f32 %v447, %v583
        %v593 = vmul.f32 %v466, %v584
        %v594 = vmul.f32 %v430, %v582
        %v595 = vmul.f32 %v449, %v583
        %v596 = vmul.f32 %v468, %v584
        %v597 = vadd.f32 %v585, %v586
        %vm598 = vcmask 261120
        %v599 = vsel %vm598, %v587, 0.0
        %v600 = vadd.f32 %v597, %v599
        %601 = vadd.xlane.f32.xlu0 %v600
        %v602 = vpop.xlane.xlu0 %601
        %v603 = vadd.f32 %v588, %v589
        %v604 = vsel %vm598, %v590, 0.0
        %v605 = vadd.f32 %v603, %v604
        %606 = vadd.xlane.f32.xlu0 %v605
        %v607 = vpop.xlane.xlu0 %606
        %v608 = vadd.f32 %v591, %v592
        %v609 = vsel %vm598, %v593, 0.0
        %v610 = vadd.f32 %v608, %v609
        %611 = vadd.xlane.f32.xlu0 %v610
        %v612 = vpop.xlane.xlu0 %611
        %v613 = vadd.f32 %v594, %v595
        %v614 = vsel %vm598, %v596, 0.0
        %v615 = vadd.f32 %v613, %v614
        %616 = vadd.xlane.f32.xlu0 %v615
        %v617 = vpop.xlane.xlu0 %616
        %v618 = vrot.slane %v602, 4
        %v619 = vadd.f32 %v602, %v618
        %v620 = vrot.slane %v619, 2
        %v621 = vadd.f32 %v619, %v620
        %v622 = vrot.slane %v621, 1
        %v623 = vadd.f32 %v621, %v622
        %v624 = vrot.slane %v607, 4
        %v625 = vadd.f32 %v607, %v624
        %v626 = vrot.slane %v625, 2
        %v627 = vadd.f32 %v625, %v626
        %v628 = vrot.slane %v627, 1
        %v629 = vadd.f32 %v627, %v628
        %v630 = vrot.slane %v612, 4
        %v631 = vadd.f32 %v612, %v630
        %v632 = vrot.slane %v631, 2
        %v633 = vadd.f32 %v631, %v632
        %v634 = vrot.slane %v633, 1
        %v635 = vadd.f32 %v633, %v634
        %v636 = vrot.slane %v617, 4
        %v637 = vadd.f32 %v617, %v636
        %v638 = vrot.slane %v637, 2
        %v639 = vadd.f32 %v637, %v638
        %v640 = vrot.slane %v639, 1
        %v641 = vadd.f32 %v639, %v640
        %v642 = vrcp.pop 2048.0
        %v643 = vmul.f32 2048.0, %v642
        %v644 = vsub.f32 1.0, %v643
        %v645 = vmul.f32 %v642, %v644
        %v646 = vadd.f32 %v642, %v645
        %vm647 = vweird.f32 %v642
        %v648 = vsel %vm647, %v642, %v646
        %v649 = vmul.f32 %v623, %v648
        %v650 = vmul.f32 %v629, %v648
        %v651 = vmul.f32 %v635, %v648
        %v652 = vmul.f32 %v641, %v648
        %v653 = vsub.f32 %v423, %v649
        %v654 = vsub.f32 %v442, %v649
        %v655 = vsub.f32 %v461, %v649
        %v656 = vsub.f32 %v425, %v650
        %v657 = vsub.f32 %v444, %v650
        %v658 = vsub.f32 %v463, %v650
        %v659 = vsub.f32 %v428, %v651
        %v660 = vsub.f32 %v447, %v651
        %v661 = vsub.f32 %v466, %v651
        %v662 = vsub.f32 %v430, %v652
        %v663 = vsub.f32 %v449, %v652
        %v664 = vsub.f32 %v468, %v652
        %v665 = vmul.f32 %v653, %v582
        %v666 = vmul.f32 %v654, %v583
        %v667 = vmul.f32 %v655, %v584
        %v668 = vmul.f32 %v656, %v582
        %v669 = vmul.f32 %v657, %v583
        %v670 = vmul.f32 %v658, %v584
        %v671 = vmul.f32 %v659, %v582
        %v672 = vmul.f32 %v660, %v583
        %v673 = vmul.f32 %v661, %v584
        %v674 = vmul.f32 %v662, %v582
        %v675 = vmul.f32 %v663, %v583
        %v676 = vmul.f32 %v664, %v584
        %v677 = vmul.f32 %v665, %v665
        %v678 = vmul.f32 %v666, %v666
        %v679 = vmul.f32 %v667, %v667
        %v680 = vmul.f32 %v668, %v668
        %v681 = vmul.f32 %v669, %v669
        %v682 = vmul.f32 %v670, %v670
        %v683 = vmul.f32 %v671, %v671
        %v684 = vmul.f32 %v672, %v672
        %v685 = vmul.f32 %v673, %v673
        %v686 = vmul.f32 %v674, %v674
        %v687 = vmul.f32 %v675, %v675
        %v688 = vmul.f32 %v676, %v676
        %v689 = vadd.f32 %v677, %v678
        %v690 = vsel %vm598, %v679, 0.0
        %v691 = vadd.f32 %v689, %v690
        %692 = vadd.xlane.f32.xlu0 %v691
        %v693 = vpop.xlane.xlu0 %692
        %v694 = vadd.f32 %v680, %v681
        %v695 = vsel %vm598, %v682, 0.0
        %v696 = vadd.f32 %v694, %v695
        %697 = vadd.xlane.f32.xlu0 %v696
        %v698 = vpop.xlane.xlu0 %697
        %v699 = vadd.f32 %v683, %v684
        %v700 = vsel %vm598, %v685, 0.0
        %v701 = vadd.f32 %v699, %v700
        %702 = vadd.xlane.f32.xlu0 %v701
        %v703 = vpop.xlane.xlu0 %702
        %v704 = vadd.f32 %v686, %v687
        %v705 = vsel %vm598, %v688, 0.0
        %v706 = vadd.f32 %v704, %v705
        %707 = vadd.xlane.f32.xlu0 %v706
        %v708 = vpop.xlane.xlu0 %707
        %v709 = vrot.slane %v693, 4
        %v710 = vadd.f32 %v693, %v709
        %v711 = vrot.slane %v710, 2
        %v712 = vadd.f32 %v710, %v711
        %v713 = vrot.slane %v712, 1
        %v714 = vadd.f32 %v712, %v713
        %v715 = vrot.slane %v698, 4
        %v716 = vadd.f32 %v698, %v715
        %v717 = vrot.slane %v716, 2
        %v718 = vadd.f32 %v716, %v717
        %v719 = vrot.slane %v718, 1
        %v720 = vadd.f32 %v718, %v719
        %v721 = vrot.slane %v703, 4
        %v722 = vadd.f32 %v703, %v721
        %v723 = vrot.slane %v722, 2
        %v724 = vadd.f32 %v722, %v723
        %v725 = vrot.slane %v724, 1
        %v726 = vadd.f32 %v724, %v725
        %v727 = vrot.slane %v708, 4
        %v728 = vadd.f32 %v708, %v727
        %v729 = vrot.slane %v728, 2
        %v730 = vadd.f32 %v728, %v729
        %v731 = vrot.slane %v730, 1
        %v732 = vadd.f32 %v730, %v731
        %v733 = vmul.f32 %v714, %v648
        %v734 = vmul.f32 %v720, %v648
        %v735 = vmul.f32 %v726, %v648
        %v736 = vmul.f32 %v732, %v648
        %v737 = vadd.f32 %v733, 1e-05
        %v738 = vadd.f32 %v734, 1e-05
        %v739 = vadd.f32 %v735, 1e-05
        %v740 = vadd.f32 %v736, 1e-05
        %v741 = vrsqrt.pop %v737
        %v742 = vmul.f32 %v741, %v737
        %v743 = vmul.f32 %v742, %v741
        %v744 = vmul.f32 0.5, %v743
        %v745 = vsub.f32 1.5, %v744
        %v746 = vmul.f32 %v741, %v745
        %vm747 = vweird.f32 %v737
        %vm748 = vweird.f32 %v741
        %vm749 = vmor %vm747, %vm748
        %v750 = vsel %vm749, %v741, %v746
        %v751 = vrsqrt.pop %v738
        %v752 = vmul.f32 %v751, %v738
        %v753 = vmul.f32 %v752, %v751
        %v754 = vmul.f32 0.5, %v753
        %v755 = vsub.f32 1.5, %v754
        %v756 = vmul.f32 %v751, %v755
        %vm757 = vweird.f32 %v738
        %vm758 = vweird.f32 %v751
        %vm759 = vmor %vm757, %vm758
        %v760 = vsel %vm759, %v751, %v756
        %v761 = vrsqrt.pop %v739
        %v762 = vmul.f32 %v761, %v739
        %v763 = vmul.f32 %v762, %v761
        %v764 = vmul.f32 0.5, %v763
        %v765 = vsub.f32 1.5, %v764
        %v766 = vmul.f32 %v761, %v765
        %vm767 = vweird.f32 %v739
        %vm768 = vweird.f32 %v761
        %vm769 = vmor %vm767, %vm768
        %v770 = vsel %vm769, %v761, %v766
        %v771 = vrsqrt.pop %v740
        %v772 = vmul.f32 %v771, %v740
        %v773 = vmul.f32 %v772, %v771
        %v774 = vmul.f32 0.5, %v773
        %v775 = vsub.f32 1.5, %v774
        %v776 = vmul.f32 %v771, %v775
        %vm777 = vweird.f32 %v740
        %vm778 = vweird.f32 %v771
        %vm779 = vmor %vm777, %vm778
        %v780 = vsel %vm779, %v771, %v776
        %v781 = vmul.f32 %v372, %v750
        %v782 = vmul.f32 %v373, %v760
        %v783 = vmul.f32 %v374, %v770
        %v784 = vmul.f32 %v375, %v780
        %v785 = vmul.f32 %v649, %v781
        %v786 = vmul.f32 %v650, %v782
        %v787 = vmul.f32 %v651, %v783
        %v788 = vmul.f32 %v652, %v784
        %793 = vrot.lane.b32.xlu0 %v785, 1
        %v794 = vpop.permute.xlu0 %793
        %795 = vrot.lane.b32.xlu0 %v786, 1
        %v796 = vpop.permute.xlu0 %795
        %797 = vrot.lane.b32.xlu0 %v787, 1
        %v798 = vpop.permute.xlu0 %797
        %799 = vrot.lane.b32.xlu0 %v788, 1
        %v800 = vpop.permute.xlu0 %799
        %v805 = vsub.f32 %v372, %v794
        %v806 = vsub.f32 %v373, %v796
        %v807 = vsub.f32 %v374, %v798
        %v808 = vsub.f32 %v375, %v800
        %810 = vset.pattern.permute.xlu0 1
        %811 = vperm.xlu0 %810, %v781
        %v812 = vpop.permute.xlu0 %811
        %815 = vset.pattern.permute.xlu0 1
        %816 = vperm.xlu0 %815, %v782
        %v817 = vpop.permute.xlu0 %816
        %820 = vset.pattern.permute.xlu0 1
        %821 = vperm.xlu0 %820, %v783
        %v822 = vpop.permute.xlu0 %821
        %825 = vset.pattern.permute.xlu0 1
        %826 = vperm.xlu0 %825, %v784
        %v827 = vpop.permute.xlu0 %826
        %v829 = vmul.f32 %v423, %v812
        %v830 = vmul.f32 %v442, %v812
        %v831 = vmul.f32 %v461, %v812
        %v832 = vmul.f32 %v425, %v817
        %v833 = vmul.f32 %v444, %v817
        %v834 = vmul.f32 %v463, %v817
        %v835 = vmul.f32 %v428, %v822
        %v836 = vmul.f32 %v447, %v822
        %v837 = vmul.f32 %v466, %v822
        %v838 = vmul.f32 %v430, %v827
        %v839 = vmul.f32 %v449, %v827
        %v840 = vmul.f32 %v468, %v827
        %842 = vset.pattern.permute.xlu0 2
        %843 = vperm.xlu0 %842, %v805
        %v844 = vpop.permute.xlu0 %843
        %847 = vset.pattern.permute.xlu0 2
        %848 = vperm.xlu0 %847, %v806
        %v849 = vpop.permute.xlu0 %848
        %852 = vset.pattern.permute.xlu0 2
        %853 = vperm.xlu0 %852, %v807
        %v854 = vpop.permute.xlu0 %853
        %857 = vset.pattern.permute.xlu0 2
        %858 = vperm.xlu0 %857, %v808
        %v859 = vpop.permute.xlu0 %858
        %v861 = vadd.f32 %v829, %v844
        %v862 = vadd.f32 %v830, %v844
        %v863 = vadd.f32 %v831, %v844
        %v864 = vadd.f32 %v832, %v849
        %v865 = vadd.f32 %v833, %v849
        %v866 = vadd.f32 %v834, %v849
        %v867 = vadd.f32 %v835, %v854
        %v868 = vadd.f32 %v836, %v854
        %v869 = vadd.f32 %v837, %v854
        %v870 = vadd.f32 %v838, %v859
        %v871 = vadd.f32 %v839, %v859
        %v872 = vadd.f32 %v840, %v859
        %v873 = vsub.f32 0.0, %v861
        %v874 = vsub.f32 0.0, %v862
        %v875 = vsub.f32 0.0, %v863
        %v876 = vsub.f32 0.0, %v864
        %v877 = vsub.f32 0.0, %v865
        %v878 = vsub.f32 0.0, %v866
        %v879 = vsub.f32 0.0, %v867
        %v880 = vsub.f32 0.0, %v868
        %v881 = vsub.f32 0.0, %v869
        %v882 = vsub.f32 0.0, %v870
        %v883 = vsub.f32 0.0, %v871
        %v884 = vsub.f32 0.0, %v872
        %v885 = vmul.f32 %v873, 1.442695
        %v886 = vpow.pop %v885
        %v887 = vmul.f32 %v874, 1.442695
        %v888 = vpow.pop %v887
        %v889 = vmul.f32 %v875, 1.442695
        %v890 = vpow.pop %v889
        %v891 = vmul.f32 %v876, 1.442695
        %v892 = vpow.pop %v891
        %v893 = vmul.f32 %v877, 1.442695
        %v894 = vpow.pop %v893
        %v895 = vmul.f32 %v878, 1.442695
        %v896 = vpow.pop %v895
        %v897 = vmul.f32 %v879, 1.442695
        %v898 = vpow.pop %v897
        %v899 = vmul.f32 %v880, 1.442695
        %v900 = vpow.pop %v899
        %v901 = vmul.f32 %v881, 1.442695
        %v902 = vpow.pop %v901
        %v903 = vmul.f32 %v882, 1.442695
        %v904 = vpow.pop %v903
        %v905 = vmul.f32 %v883, 1.442695
        %v906 = vpow.pop %v905
        %v907 = vmul.f32 %v884, 1.442695
        %v908 = vpow.pop %v907
        %v909 = vadd.f32 %v886, 1.0
        %v910 = vadd.f32 %v888, 1.0
        %v911 = vadd.f32 %v890, 1.0
        %v912 = vadd.f32 %v892, 1.0
        %v913 = vadd.f32 %v894, 1.0
        %v914 = vadd.f32 %v896, 1.0
        %v915 = vadd.f32 %v898, 1.0
        %v916 = vadd.f32 %v900, 1.0
        %v917 = vadd.f32 %v902, 1.0
        %v918 = vadd.f32 %v904, 1.0
        %v919 = vadd.f32 %v906, 1.0
        %v920 = vadd.f32 %v908, 1.0
        %v921 = vrcp.pop %v909
        %v922 = vrcp.pop %v910
        %v923 = vrcp.pop %v911
        %v924 = vrcp.pop %v912
        %v925 = vrcp.pop %v913
        %v926 = vrcp.pop %v914
        %v927 = vrcp.pop %v915
        %v928 = vrcp.pop %v916
        %v929 = vrcp.pop %v917
        %v930 = vrcp.pop %v918
        %v931 = vrcp.pop %v919
        %v932 = vrcp.pop %v920
        %v933 = vmul.f32 %v861, %v921
        %v934 = vmul.f32 %v862, %v922
        %v935 = vmul.f32 %v863, %v923
        %v936 = vmul.f32 %v864, %v924
        %v937 = vmul.f32 %v865, %v925
        %v938 = vmul.f32 %v866, %v926
        %v939 = vmul.f32 %v867, %v927
        %v940 = vmul.f32 %v868, %v928
        %v941 = vmul.f32 %v869, %v929
        %v942 = vmul.f32 %v870, %v930
        %v943 = vmul.f32 %v871, %v931
        %v944 = vmul.f32 %v872, %v932
        %945 = vst [vmem:[%s234] sm:$0xff] %v933
        %946 = vst [vmem:[%s234 + $0x8] sm:$0xff] %v934
        %947 = vst.msk [vmem:[%s234 + $0x10] sm:$0xff] %vm598, %v935
        %948 = vst [vmem:[%s234 + $0x18] sm:$0xff] %v936
        %949 = vst [vmem:[%s234 + $0x20] sm:$0xff] %v937
        %950 = vst.msk [vmem:[%s234 + $0x28] sm:$0xff] %vm598, %v938
        %951 = vst [vmem:[%s234 + $0x30] sm:$0xff] %v939
        %952 = vst [vmem:[%s234 + $0x38] sm:$0xff] %v940
        %953 = vst.msk [vmem:[%s234 + $0x40] sm:$0xff] %vm598, %v941
        %954 = vst [vmem:[%s234 + $0x48] sm:$0xff] %v942
        %955 = vst [vmem:[%s234 + $0x50] sm:$0xff] %v943
        %956 = vst.msk [vmem:[%s234 + $0x58] sm:$0xff] %vm598, %v944
        %s957 = sand.u32 %s120, 1
        %s958 = scalar_lea.sflag [#allocation4], %s957
        %s959 = sand.u32 %s120, 1
        %s960 = smul.addr %s959, 96
        %s961 = scalar_lea.vmem [#allocation5], %s960
        // Predicated region
        $region37: #{tpu_custom_call.1} parent=31 // pred_check
          %p962 = pneg %p130
        $region38: #{tpu_custom_call.1} parent=31 // pred_check_branch
          %964 = sbr.rel (%p962) target = $region40
        $region39: #{tpu_custom_call.1} parent=31 // pred_region
          %s965 = smul.u32 4, %s25
          %967 = vsyncadd %s958, 0
          %s968 = smul.addr %s965, 3
          %s969 = smul.addr %s24, 12
          %s970 = sadd.s32 %s968, %s969
          %s971 = smul.addr %s970, 8
          %s972 = scalar_lea.hbm %s3, %s971
          %s973 = sshll.u32 %s961, 4
          %s974 = int_to_ptr.vmem [resolvable:$true] %s973
          %s975 = sshll.u32 %s972, 4
          %s976 = int_to_ptr.hbm [resolvable:$true] %s975
          %981 = dma.vmem_to_hbm [thread:$0]  %s974, 1536, %s976, %s958, 384, 384, 24
        $region40: #{tpu_custom_call.1} parent=31 // pred_fallthru
          _
      $region32: #{tpu_custom_call.1} parent=5 // pred_fallthru
        _
      %p982 = scmp.le.s32.totalorder 2, %s15
      // Predicated region
      $region41: #{tpu_custom_call.1} parent=5 // pred_check
        %p983 = pneg %p982
      $region42: #{tpu_custom_call.1} parent=5 // pred_check_branch
        %985 = sbr.rel (%p983) target = $region44
      $region43: #{tpu_custom_call.1} parent=5 // pred_region
        %s986 = ssub.s32 %s15, 2
        // Predicated region
        $region45: #{tpu_custom_call.1} parent=43 // pred_check
          %p987 = pneg %p136
        $region46: #{tpu_custom_call.1} parent=43 // pred_check_branch
          %989 = sbr.rel (%p987) target = $region48
        $region47: #{tpu_custom_call.1} parent=43 // pred_region
          %s990 = sand.u32 %s121, 1
          %s991 = scalar_lea.sflag [#allocation4], %s990
          %s992 = sand.u32 %s121, 1
          %s993 = smul.addr %s992, 96
          %s994 = scalar_lea.vmem [#allocation5], %s993
          %996 = dma.done %s991, 1536
        $region48: #{tpu_custom_call.1} parent=43 // pred_fallthru
          _
      $region44: #{tpu_custom_call.1} parent=5 // pred_fallthru
        _
    $region6: #{tpu_custom_call.1} parent=1 // loop_footer
      %s19 = sadd.s32 1, %s15
    $region7: #{tpu_custom_call.1} parent=1 // loop_footer_branch
      %14 = sbr.rel target = $region3
    $region8: #{tpu_custom_call.1} parent=1 // loop_exit
      _
    %997 = vsyncpa [#allocation3], 1
    %s998 = scalar_lea.sflag [#allocation3], 1
    %999 = vsyncpa %s998, 1
    %1000 = vsyncpa [#allocation4], 1
    %s1001 = scalar_lea.sflag [#allocation4], 1
    %1002 = vsyncpa %s1001, 1

</llo_original>
